<compile_context>
chip_gen: v6e
topology: v6e:2x2x1
jax: 0.10.0
libtpu: 0.0.40
codegen_flags: <defaults>
</compile_context>

<pallas_src>
import math
import jax
import jax.numpy as jnp
from jax.experimental import pallas as pl
from jax.experimental.pallas import tpu as pltpu


# ----------------------------- small helpers ---------------------------------

def _round_up(x, m):
    return ((x + m - 1) // m) * m


def _choose_row_tile(M, tm):
    """Row (M) tile: multiple of 32 (safe packing for int8/bf16) or the full padded
    dim; prefer a divisor of M so the activation never needs a jnp.pad copy."""
    tm = max(32, (tm // 32) * 32)
    if M <= tm:
        m_pad = M if M % 8 == 0 else _round_up(M, 8)
        return m_pad, m_pad
    for t in range(tm, max(32, tm // 2) - 1, -32):
        if M % t == 0:
            return t, M
    return tm, _round_up(M, tm)


def _choose_col_tile(N, tn):
    """Output-column (N) tile: multiple of 128 (lane-dense) or the full dim."""
    tn = max(128, (tn // 128) * 128)
    if N <= tn:
        return N, N
    for t in range(tn, tn // 2 - 1, -128):
        if N % t == 0:
            return t, N
    return tn, _round_up(N, tn)


def _choose_k_tile(K, tk):
    """Reduction (K) tile: multiple of 128 (it is the last dim of the x tiles) or
    the full dim; prefer a divisor of K so no K padding is needed."""
    tk = max(128, (tk // 128) * 128)
    if K <= tk:
        return K, K
    for t in range(tk, tk // 2 - 1, -128):
        if K % t == 0:
            return t, K
    return tk, _round_up(K, tk)


def _default_base_mode():
    """int8 MXU on v5/v6 (native i8 path, exact for <=8-bit codes); bf16 elsewhere
    (v7x MXU is bf16+fp8 only, unknown parts default to the safe path)."""
    try:
        kind = jax.devices()[0].device_kind.lower()
    except Exception:
        return "bf16"
    if ("v5" in kind) or ("v6" in kind):
        return "int8"
    return "bf16"


def _sym_fake_quant(t, bits):
    """Symmetric per-tensor fake quantization (quantize-dequantize), reference path."""
    qmax = 2.0 ** (bits - 1) - 1.0
    scale = jnp.maximum(jnp.max(jnp.abs(t)) / qmax, 1e-8)
    return jnp.clip(jnp.round(t / scale), -qmax, qmax) * scale


# ------------------------------- kernel --------------------------------------

def _make_kernel(base_int8):
    def kernel(scales_ref, xq_ref, x_ref, wq_ref, wl_ref, b_ref, o_ref,
               acc_base_ref, acc_lora_ref):
        k = pl.program_id(2)

        @pl.when(k == 0)
        def _():
            acc_base_ref[...] = jnp.zeros_like(acc_base_ref)
            acc_lora_ref[...] = jnp.zeros_like(acc_lora_ref)

        # Quantized base linear: integer-code matmul (exact), per-tensor scales folded
        # once onto the output at the last K step.
        if base_int8:
            acc_base_ref[...] += jnp.dot(xq_ref[...], wq_ref[...],
                                         preferred_element_type=jnp.int32)
        else:
            acc_base_ref[...] += jnp.dot(xq_ref[...], wq_ref[...],
                                         preferred_element_type=jnp.float32)

        # LoRA adapter path: dense weight with (alpha/r)*B@A already merged (glue),
        # bf16 operands, f32 accumulation.
        acc_lora_ref[...] += jnp.dot(x_ref[...], wl_ref[...],
                                     preferred_element_type=jnp.float32)

        @pl.when(k == pl.num_programs(2) - 1)
        def _():
            out_s = scales_ref[0]                      # a_scale * w_scale (SMEM)
            o_ref[...] = (acc_base_ref[...].astype(jnp.float32) * out_s
                          + acc_lora_ref[...] + b_ref[...]).astype(o_ref.dtype)

    return kernel


# ------------------------- weight-side preparation ----------------------------

def prepare_qlora_params(params, *, w_bits, lora_r, lora_alpha,
                         tn=256, tk=512, base_mode="auto"):
    """One-time preprocessing for a given (weight bit-width, adapter) selection.
    Cache the result and reuse it for every forward call (this is the hot-path hoist
    requested by the perf review; 'switchable' state is a static selection anyway)."""
    if base_mode == "auto":
        base_mode = _default_base_mode()
    code_dtype = jnp.int8 if base_mode == "int8" else jnp.bfloat16

    w = params["w"].astype(jnp.float32)                                   # (N, K)
    N, K = w.shape
    w_qmax = 2.0 ** (w_bits - 1) - 1.0
    w_scale = jnp.maximum(jnp.max(jnp.abs(w)) / w_qmax, 1e-8)
    wq_codes = jnp.clip(jnp.round(w / w_scale), -w_qmax, w_qmax)          # integer codes
    wq = wq_codes.T.astype(code_dtype)                                    # (K, N)

    # Merge the LoRA low-rank update into the adapter's dense weight (forward-only,
    # identical to the two-stage (x@A^T)@B^T path).
    scaling = float(lora_alpha) / float(lora_r)
    wl_eff = params["lora_w"] + scaling * (params["lora_B"] @ params["lora_A"])  # (N,K)
    wl = wl_eff.T.astype(jnp.bfloat16)                                    # (K, N)

    bias = (params["b"] + params["lora_b"]).reshape(1, N).astype(jnp.float32)

    tn_eff, N_pad = _choose_col_tile(N, tn)
    tk_eff, K_pad = _choose_k_tile(K, tk)

    wq = jnp.pad(wq, ((0, K_pad - K), (0, N_pad - N)))
    wl = jnp.pad(wl, ((0, K_pad - K), (0, N_pad - N)))
    bias = jnp.pad(bias, ((0, 0), (0, N_pad - N)))

    return dict(wq=wq, wl=wl, bias=bias, w_scale=w_scale,
                base_mode=base_mode, code_dtype=code_dtype,
                N=N, K=K, N_pad=N_pad, K_pad=K_pad, tn=tn_eff, tk=tk_eff)


# --------------------------------- forward ------------------------------------

def quantize_linear_with_lora_switchable(x, prep, *, a_bits, tm=256):
    """x: (B, S, in_features) float32 -> (B, S, out_features) float32."""
    B, S, K = x.shape
    assert K == prep["K"], "in_features mismatch with prepared weights"
    N, N_pad, K_pad = prep["N"], prep["N_pad"], prep["K_pad"]
    tn, tk = prep["tn"], prep["tk"]
    base_int8 = prep["base_mode"] == "int8"

    M = B * S
    xm = x.reshape(M, K).astype(jnp.float32)

    # Activation fake-quant hoisted out of the kernel (computed once per call; the
    # scale is a global reduction over x, matching the reference semantics).
    a_qmax = 2.0 ** (a_bits - 1) - 1.0
    a_scale = jnp.maximum(jnp.max(jnp.abs(xm)) / a_qmax, 1e-8)
    xq = jnp.clip(jnp.round(xm / a_scale), -a_qmax, a_qmax).astype(prep["code_dtype"])
    xb = xm.astype(jnp.bfloat16)                       # LoRA/dense-path operand

    tm_eff, M_pad = _choose_row_tile(M, tm)
    if M_pad != M or K_pad != K:
        xq = jnp.pad(xq, ((0, M_pad - M), (0, K_pad - K)))
        xb = jnp.pad(xb, ((0, M_pad - M), (0, K_pad - K)))

    out_s = (a_scale * prep["w_scale"]).reshape(1).astype(jnp.float32)

    gm, gn, gk = M_pad // tm_eff, N_pad // tn, K_pad // tk

    # Grid order of the two output axes: when the K axis collapses to a single step,
    # the operand whose block index ignores the inner axis stays VMEM-resident (its
    # DMA is skipped), so keep the larger streamed operand on the outer axis.
    x_bytes = M_pad * K_pad * ((1 if base_int8 else 2) + 2)
    w_bytes = K_pad * N_pad * ((1 if base_int8 else 2) + 2)
    m_outer = x_bytes >= w_bytes

    if m_outer:
        grid = (gm, gn, gk)
        x_map = lambda i, j, k: (i, k)
        w_map = lambda i, j, k: (k, j)
        b_map = lambda i, j, k: (0, j)
        o_map = lambda i, j, k: (i, j)
    else:
        grid = (gn, gm, gk)
        x_map = lambda j, i, k: (i, k)
        w_map = lambda j, i, k: (k, j)
        b_map = lambda j, i, k: (0, j)
        o_map = lambda j, i, k: (i, j)

    kernel = _make_kernel(base_int8)
    acc_base_dtype = jnp.int32 if base_int8 else jnp.float32

    out = pl.pallas_call(
        kernel,
        out_shape=jax.ShapeDtypeStruct((M_pad, N_pad), jnp.float32),
        grid=grid,
        in_specs=[
            pl.BlockSpec(memory_space=pltpu.MemorySpace.SMEM),   # out_s scalar
            pl.BlockSpec((tm_eff, tk), x_map),                   # activation codes
            pl.BlockSpec((tm_eff, tk), x_map),                   # x (bf16, LoRA path)
            pl.BlockSpec((tk, tn), w_map),                       # quantized W codes
            pl.BlockSpec((tk, tn), w_map),                       # merged LoRA weight
            pl.BlockSpec((1, tn), b_map),                        # combined bias
        ],
        out_specs=pl.BlockSpec((tm_eff, tn), o_map),
        scratch_shapes=[
            pltpu.VMEM((tm_eff, tn), acc_base_dtype),            # base accumulator
            pltpu.VMEM((tm_eff, tn), jnp.float32),               # LoRA accumulator
        ],
        compiler_params=pltpu.CompilerParams(
            dimension_semantics=("parallel", "parallel", "arbitrary"),
            vmem_limit_bytes=48 * 1024 * 1024),
    )(out_s, xq, xb, prep["wq"], prep["wl"], prep["bias"])

    return out[:M, :N].reshape(B, S, N).astype(x.dtype)


# ------------------------------- reference ------------------------------------

def _reference(x, params, *, w_bits, a_bits, lora_r, lora_alpha):
    B, S, K = x.shape
    N = params["w"].shape[0]
    xm = x.reshape(B * S, K)
    wq = _sym_fake_quant(params["w"], w_bits)
    xq = _sym_fake_quant(xm, a_bits)
    base = xq @ wq.T + params["b"]
    dense = xm @ params["lora_w"].T + params["lora_b"]
    lora = (xm @ params["lora_A"].T) @ params["lora_B"].T * (lora_alpha / lora_r)
    return (base + dense + lora).reshape(B, S, N)


# --------------------------------- demo ---------------------------------------

if __name__ == "__main__":
    # Module config (small, consistent with a GPT2-ish linear)
    in_features, out_features = 32, 32
    B, Seq = 2, 8
    candidate_w_bits = [8, 4]
    candidate_a_bits = [8, 4]
    active_w_idx, active_a_idx = 0, 0            # set_active_bitwidth(0, 0)
    lora_configs = [{"r": 8, "alpha": 16, "dropout": 0.0, "enable_lora": [True]}]
    active_lora_idx = 0                          # set_active_lora(0)
    r = lora_configs[active_lora_idx]["r"]
    alpha = lora_configs[active_lora_idx]["alpha"]
    w_bits = candidate_w_bits[active_w_idx]
    a_bits = candidate_a_bits[active_a_idx]

    key = jax.random.PRNGKey(0)
    k = jax.random.split(key, 8)
    bound = 1.0 / math.sqrt(in_features)
    params = {
        # QuantizeLinear params (out, in) + bias
        "w": jax.random.uniform(k[0], (out_features, in_features), jnp.float32, -bound, bound),
        "b": jax.random.uniform(k[1], (out_features,), jnp.float32, -bound, bound),
        # lora.MergedLinear dense params
        "lora_w": jax.random.uniform(k[2], (out_features, in_features), jnp.float32, -bound, bound),
        "lora_b": jax.random.uniform(k[3], (out_features,), jnp.float32, -bound, bound),
        # LoRA low-rank factors. NOTE: loralib inits lora_B to zeros; we use small
        # random values so the low-rank path is actually exercised.
        "lora_A": jax.random.normal(k[4], (r, in_features), jnp.float32) * 0.02,
        "lora_B": jax.random.normal(k[5], (out_features, r), jnp.float32) * 0.02,
    }
    # TODO(synk): lora_dropout > 0 (training-time RNG dropout) not implemented; configs use 0.0.

    x = jax.random.normal(k[6], (B, Seq, in_features), jnp.float32)

    def run(mode):
        # One-time weight prep per (bit-width, adapter) selection; reused across forwards.
        prep = prepare_qlora_params(params, w_bits=w_bits, lora_r=r,
                                    lora_alpha=alpha, base_mode=mode)
        return quantize_linear_with_lora_switchable(x, prep, a_bits=a_bits)

    try:
        out = jax.block_until_ready(run("auto"))
    except Exception:
        # Defensive fallback: bf16 base matmul works on every TPU generation.
        out = jax.block_until_ready(run("bf16"))

    ref = _reference(x, params, w_bits=w_bits, a_bits=a_bits,
                     lora_r=r, lora_alpha=alpha)
    assert out.shape == (B, Seq, out_features)
    # bf16 operands on the LoRA/dense path (f32 accumulation) -> loosened tolerance;
    # the quantized base matmul is exact in integer codes (int8 path) or near-exact (bf16).
    assert jnp.allclose(out, ref, rtol=5e-2, atol=5e-2), "mismatch vs reference"
    print("KERNEL_OK")
</pallas_src>

<mosaic_0001>
module attributes {stable_mosaic.version = 11 : i64} {
  func.func @kernel(%arg0: i32, %arg1: i32, %arg2: i32, %arg3: memref<1xf32, #tpu.memory_space<smem>>, %arg4: memref<16x32xbf16, #tpu.memory_space<vmem>>, %arg5: memref<16x32xbf16, #tpu.memory_space<vmem>>, %arg6: memref<32x32xbf16, #tpu.memory_space<vmem>>, %arg7: memref<32x32xbf16, #tpu.memory_space<vmem>>, %arg8: memref<1x32xf32, #tpu.memory_space<vmem>>, %arg9: memref<16x32xf32, #tpu.memory_space<vmem>>, %arg10: memref<16x32xf32, #tpu.memory_space<vmem>>, %arg11: memref<16x32xf32, #tpu.memory_space<vmem>>) attributes {dimension_semantics = [#tpu.dimension_semantics<parallel>, #tpu.dimension_semantics<parallel>, #tpu.dimension_semantics<arbitrary>], iteration_bounds = array<i64: 1, 1, 1>, scalar_prefetch = 0 : i64, scratch_operands = 2 : i64, tpu.core_type = #tpu.core_type<tc>, window_params = [{transform_indices = @transform_0, window_bounds = array<i64: 1>}, {transform_indices = @transform_1, window_bounds = array<i64: 16, 32>}, {transform_indices = @transform_2, window_bounds = array<i64: 16, 32>}, {transform_indices = @transform_3, window_bounds = array<i64: 32, 32>}, {transform_indices = @transform_4, window_bounds = array<i64: 32, 32>}, {transform_indices = @transform_5, window_bounds = array<i64: 1, 32>}, {transform_indices = @transform_6, window_bounds = array<i64: 16, 32>}]} {
    %c0_i32 = arith.constant 0 : i32
    %0 = arith.cmpi eq, %arg2, %c0_i32 : i32
    %1 = arith.extui %0 : i1 to i32
    %c0_i32_0 = arith.constant 0 : i32
    %2 = arith.cmpi ne, %1, %c0_i32_0 : i32
    scf.if %2 {
      %cst_19 = arith.constant 0.000000e+00 : f32
      %18 = vector.broadcast %cst_19 : f32 to vector<16x32xf32>
      %c0_20 = arith.constant 0 : index
      %c0_21 = arith.constant 0 : index
      %19 = vector.load %arg10[%c0_20, %c0_21] : memref<16x32xf32, #tpu.memory_space<vmem>>, vector<16x32xf32>
      tpu.vector_store %arg10[%c0_20, %c0_21], %18 {strides = array<i32>} : memref<16x32xf32, #tpu.memory_space<vmem>>, vector<16x32xf32>,
      %cst_22 = arith.constant 0.000000e+00 : f32
      %20 = vector.broadcast %cst_22 : f32 to vector<16x32xf32>
      %c0_23 = arith.constant 0 : index
      %c0_24 = arith.constant 0 : index
      %21 = vector.load %arg11[%c0_23, %c0_24] : memref<16x32xf32, #tpu.memory_space<vmem>>, vector<16x32xf32>
      tpu.vector_store %arg11[%c0_23, %c0_24], %20 {strides = array<i32>} : memref<16x32xf32, #tpu.memory_space<vmem>>, vector<16x32xf32>,
    } else {
    }
    %c0 = arith.constant 0 : index
    %c0_1 = arith.constant 0 : index
    %3 = vector.load %arg10[%c0, %c0_1] : memref<16x32xf32, #tpu.memory_space<vmem>>, vector<16x32xf32>
    %c0_2 = arith.constant 0 : index
    %c0_3 = arith.constant 0 : index
    %4 = vector.load %arg4[%c0_2, %c0_3] : memref<16x32xbf16, #tpu.memory_space<vmem>>, vector<16x32xbf16>
    %c0_4 = arith.constant 0 : index
    %c0_5 = arith.constant 0 : index
    %5 = vector.load %arg6[%c0_4, %c0_5] : memref<32x32xbf16, #tpu.memory_space<vmem>>, vector<32x32xbf16>
    %cst = arith.constant dense<0.000000e+00> : vector<16x32xf32>
    %6 = tpu.matmul %4, %5, %cst {dimension_numbers = #tpu.dot_dimension_numbers<[1], [0], [0], [1], [0, 0, 1, 1], [], []>} : vector<16x32xbf16>, vector<32x32xbf16>, vector<16x32xf32> -> vector<16x32xf32>
    %7 = arith.addf %3, %6 : vector<16x32xf32>
    %c0_6 = arith.constant 0 : index
    %c0_7 = arith.constant 0 : index
    %8 = vector.load %arg10[%c0_6, %c0_7] : memref<16x32xf32, #tpu.memory_space<vmem>>, vector<16x32xf32>
    tpu.vector_store %arg10[%c0_6, %c0_7], %7 {strides = array<i32>} : memref<16x32xf32, #tpu.memory_space<vmem>>, vector<16x32xf32>,
    %c0_8 = arith.constant 0 : index
    %c0_9 = arith.constant 0 : index
    %9 = vector.load %arg11[%c0_8, %c0_9] : memref<16x32xf32, #tpu.memory_space<vmem>>, vector<16x32xf32>
    %c0_10 = arith.constant 0 : index
    %c0_11 = arith.constant 0 : index
    %10 = vector.load %arg5[%c0_10, %c0_11] : memref<16x32xbf16, #tpu.memory_space<vmem>>, vector<16x32xbf16>
    %c0_12 = arith.constant 0 : index
    %c0_13 = arith.constant 0 : index
    %11 = vector.load %arg7[%c0_12, %c0_13] : memref<32x32xbf16, #tpu.memory_space<vmem>>, vector<32x32xbf16>
    %cst_14 = arith.constant dense<0.000000e+00> : vector<16x32xf32>
    %12 = tpu.matmul %10, %11, %cst_14 {dimension_numbers = #tpu.dot_dimension_numbers<[1], [0], [0], [1], [0, 0, 1, 1], [], []>} : vector<16x32xbf16>, vector<32x32xbf16>, vector<16x32xf32> -> vector<16x32xf32>
    %13 = arith.addf %9, %12 : vector<16x32xf32>
    %c0_15 = arith.constant 0 : index
    %c0_16 = arith.constant 0 : index
    %14 = vector.load %arg11[%c0_15, %c0_16] : memref<16x32xf32, #tpu.memory_space<vmem>>, vector<16x32xf32>
    tpu.vector_store %arg11[%c0_15, %c0_16], %13 {strides = array<i32>} : memref<16x32xf32, #tpu.memory_space<vmem>>, vector<16x32xf32>,
    %c0_i32_17 = arith.constant 0 : i32
    %15 = arith.cmpi eq, %arg2, %c0_i32_17 : i32
    %16 = arith.extui %15 : i1 to i32
    %c0_i32_18 = arith.constant 0 : i32
    %17 = arith.cmpi ne, %16, %c0_i32_18 : i32
    scf.if %17 {
      %c0_19 = arith.constant 0 : index
      %18 = memref.load %arg3[%c0_19] : memref<1xf32, #tpu.memory_space<smem>>
      %c0_20 = arith.constant 0 : index
      %c0_21 = arith.constant 0 : index
      %19 = vector.load %arg10[%c0_20, %c0_21] : memref<16x32xf32, #tpu.memory_space<vmem>>, vector<16x32xf32>
      %20 = vector.broadcast %18 : f32 to vector<16x32xf32>
      %21 = arith.mulf %19, %20 : vector<16x32xf32>
      %c0_22 = arith.constant 0 : index
      %c0_23 = arith.constant 0 : index
      %22 = vector.load %arg11[%c0_22, %c0_23] : memref<16x32xf32, #tpu.memory_space<vmem>>, vector<16x32xf32>
      %23 = arith.addf %21, %22 : vector<16x32xf32>
      %c0_24 = arith.constant 0 : index
      %c0_25 = arith.constant 0 : index
      %24 = vector.load %arg8[%c0_24, %c0_25] : memref<1x32xf32, #tpu.memory_space<vmem>>, vector<1x32xf32>
      %25 = vector.broadcast %24 : vector<1x32xf32> to vector<16x32xf32>
      %26 = arith.addf %23, %25 : vector<16x32xf32>
      %c0_26 = arith.constant 0 : index
      %c0_27 = arith.constant 0 : index
      %27 = vector.load %arg9[%c0_26, %c0_27] : memref<16x32xf32, #tpu.memory_space<vmem>>, vector<16x32xf32>
      tpu.vector_store %arg9[%c0_26, %c0_27], %26 {strides = array<i32>} : memref<16x32xf32, #tpu.memory_space<vmem>>, vector<16x32xf32>,
    } else {
    }
    return
  }
  func.func @transform_0(%arg0: i32, %arg1: i32, %arg2: i32) -> i32 {
    %c0_i32 = arith.constant 0 : i32
    %c0_i32_0 = arith.constant 0 : i32
    return %c0_i32 : i32
  }
  func.func @transform_1(%arg0: i32, %arg1: i32, %arg2: i32) -> (i32, i32) {
    %c0_i32 = arith.constant 0 : i32
    return %arg1, %arg2 : i32, i32
  }
  func.func @transform_2(%arg0: i32, %arg1: i32, %arg2: i32) -> (i32, i32) {
    %c0_i32 = arith.constant 0 : i32
    return %arg1, %arg2 : i32, i32
  }
  func.func @transform_3(%arg0: i32, %arg1: i32, %arg2: i32) -> (i32, i32) {
    %c0_i32 = arith.constant 0 : i32
    return %arg2, %arg0 : i32, i32
  }
  func.func @transform_4(%arg0: i32, %arg1: i32, %arg2: i32) -> (i32, i32) {
    %c0_i32 = arith.constant 0 : i32
    return %arg2, %arg0 : i32, i32
  }
  func.func @transform_5(%arg0: i32, %arg1: i32, %arg2: i32) -> (i32, i32) {
    %c0_i32 = arith.constant 0 : i32
    %c0_i32_0 = arith.constant 0 : i32
    return %c0_i32, %arg0 : i32, i32
  }
  func.func @transform_6(%arg0: i32, %arg1: i32, %arg2: i32) -> (i32, i32) {
    %c0_i32 = arith.constant 0 : i32
    return %arg1, %arg0 : i32, i32
  }
}

module attributes {stable_mosaic.version = 11 : i64} {
  func.func @kernel(%arg0: i32, %arg1: i32, %arg2: i32, %arg3: memref<1xf32, #tpu.memory_space<smem>>, %arg4: memref<16x32xbf16, #tpu.memory_space<vmem>>, %arg5: memref<16x32xbf16, #tpu.memory_space<vmem>>, %arg6: memref<32x32xbf16, #tpu.memory_space<vmem>>, %arg7: memref<32x32xbf16, #tpu.memory_space<vmem>>, %arg8: memref<1x32xf32, #tpu.memory_space<vmem>>, %arg9: memref<16x32xf32, #tpu.memory_space<vmem>>, %arg10: memref<16x32xf32, #tpu.memory_space<vmem>>, %arg11: memref<16x32xf32, #tpu.memory_space<vmem>>) attributes {dimension_semantics = [#tpu.dimension_semantics<parallel>, #tpu.dimension_semantics<parallel>, #tpu.dimension_semantics<arbitrary>], iteration_bounds = array<i64: 1, 1, 1>, scalar_prefetch = 0 : i64, scratch_operands = 2 : i64, tpu.core_type = #tpu.core_type<tc>, window_params = [{transform_indices = @transform_0, window_bounds = array<i64: 1>}, {transform_indices = @transform_1, window_bounds = array<i64: 16, 32>}, {transform_indices = @transform_2, window_bounds = array<i64: 16, 32>}, {transform_indices = @transform_3, window_bounds = array<i64: 32, 32>}, {transform_indices = @transform_4, window_bounds = array<i64: 32, 32>}, {transform_indices = @transform_5, window_bounds = array<i64: 1, 32>}, {transform_indices = @transform_6, window_bounds = array<i64: 16, 32>}]} {
    %c0_i32 = arith.constant 0 : i32
    %0 = arith.cmpi eq, %arg2, %c0_i32 : i32
    %1 = arith.extui %0 : i1 to i32
    %c0_i32_0 = arith.constant 0 : i32
    %2 = arith.cmpi ne, %1, %c0_i32_0 : i32
    scf.if %2 {
      %cst_19 = arith.constant 0.000000e+00 : f32
      %18 = vector.broadcast %cst_19 : f32 to vector<16x32xf32>
      %c0_20 = arith.constant 0 : index
      %c0_21 = arith.constant 0 : index
      %19 = vector.load %arg10[%c0_20, %c0_21] : memref<16x32xf32, #tpu.memory_space<vmem>>, vector<16x32xf32>
      tpu.vector_store %arg10[%c0_20, %c0_21], %18 {strides = array<i32>} : memref<16x32xf32, #tpu.memory_space<vmem>>, vector<16x32xf32>,
      %cst_22 = arith.constant 0.000000e+00 : f32
      %20 = vector.broadcast %cst_22 : f32 to vector<16x32xf32>
      %c0_23 = arith.constant 0 : index
      %c0_24 = arith.constant 0 : index
      %21 = vector.load %arg11[%c0_23, %c0_24] : memref<16x32xf32, #tpu.memory_space<vmem>>, vector<16x32xf32>
      tpu.vector_store %arg11[%c0_23, %c0_24], %20 {strides = array<i32>} : memref<16x32xf32, #tpu.memory_space<vmem>>, vector<16x32xf32>,
    } else {
    }
    %c0 = arith.constant 0 : index
    %c0_1 = arith.constant 0 : index
    %3 = vector.load %arg10[%c0, %c0_1] : memref<16x32xf32, #tpu.memory_space<vmem>>, vector<16x32xf32>
    %c0_2 = arith.constant 0 : index
    %c0_3 = arith.constant 0 : index
    %4 = vector.load %arg4[%c0_2, %c0_3] : memref<16x32xbf16, #tpu.memory_space<vmem>>, vector<16x32xbf16>
    %c0_4 = arith.constant 0 : index
    %c0_5 = arith.constant 0 : index
    %5 = vector.load %arg6[%c0_4, %c0_5] : memref<32x32xbf16, #tpu.memory_space<vmem>>, vector<32x32xbf16>
    %cst = arith.constant dense<0.000000e+00> : vector<16x32xf32>
    %6 = tpu.matmul %4, %5, %cst {dimension_numbers = #tpu.dot_dimension_numbers<[1], [0], [0], [1], [0, 0, 1, 1], [], []>} : vector<16x32xbf16>, vector<32x32xbf16>, vector<16x32xf32> -> vector<16x32xf32>
    %7 = arith.addf %3, %6 : vector<16x32xf32>
    %c0_6 = arith.constant 0 : index
    %c0_7 = arith.constant 0 : index
    %8 = vector.load %arg10[%c0_6, %c0_7] : memref<16x32xf32, #tpu.memory_space<vmem>>, vector<16x32xf32>
    tpu.vector_store %arg10[%c0_6, %c0_7], %7 {strides = array<i32>} : memref<16x32xf32, #tpu.memory_space<vmem>>, vector<16x32xf32>,
    %c0_8 = arith.constant 0 : index
    %c0_9 = arith.constant 0 : index
    %9 = vector.load %arg11[%c0_8, %c0_9] : memref<16x32xf32, #tpu.memory_space<vmem>>, vector<16x32xf32>
    %c0_10 = arith.constant 0 : index
    %c0_11 = arith.constant 0 : index
    %10 = vector.load %arg5[%c0_10, %c0_11] : memref<16x32xbf16, #tpu.memory_space<vmem>>, vector<16x32xbf16>
    %c0_12 = arith.constant 0 : index
    %c0_13 = arith.constant 0 : index
    %11 = vector.load %arg7[%c0_12, %c0_13] : memref<32x32xbf16, #tpu.memory_space<vmem>>, vector<32x32xbf16>
    %cst_14 = arith.constant dense<0.000000e+00> : vector<16x32xf32>
    %12 = tpu.matmul %10, %11, %cst_14 {dimension_numbers = #tpu.dot_dimension_numbers<[1], [0], [0], [1], [0, 0, 1, 1], [], []>} : vector<16x32xbf16>, vector<32x32xbf16>, vector<16x32xf32> -> vector<16x32xf32>
    %13 = arith.addf %9, %12 : vector<16x32xf32>
    %c0_15 = arith.constant 0 : index
    %c0_16 = arith.constant 0 : index
    %14 = vector.load %arg11[%c0_15, %c0_16] : memref<16x32xf32, #tpu.memory_space<vmem>>, vector<16x32xf32>
    tpu.vector_store %arg11[%c0_15, %c0_16], %13 {strides = array<i32>} : memref<16x32xf32, #tpu.memory_space<vmem>>, vector<16x32xf32>,
    %c0_i32_17 = arith.constant 0 : i32
    %15 = arith.cmpi eq, %arg2, %c0_i32_17 : i32
    %16 = arith.extui %15 : i1 to i32
    %c0_i32_18 = arith.constant 0 : i32
    %17 = arith.cmpi ne, %16, %c0_i32_18 : i32
    scf.if %17 {
      %c0_19 = arith.constant 0 : index
      %18 = memref.load %arg3[%c0_19] : memref<1xf32, #tpu.memory_space<smem>>
      %c0_20 = arith.constant 0 : index
      %c0_21 = arith.constant 0 : index
      %19 = vector.load %arg10[%c0_20, %c0_21] : memref<16x32xf32, #tpu.memory_space<vmem>>, vector<16x32xf32>
      %20 = vector.broadcast %18 : f32 to vector<16x32xf32>
      %21 = arith.mulf %19, %20 : vector<16x32xf32>
      %c0_22 = arith.constant 0 : index
      %c0_23 = arith.constant 0 : index
      %22 = vector.load %arg11[%c0_22, %c0_23] : memref<16x32xf32, #tpu.memory_space<vmem>>, vector<16x32xf32>
      %23 = arith.addf %21, %22 : vector<16x32xf32>
      %c0_24 = arith.constant 0 : index
      %c0_25 = arith.constant 0 : index
      %24 = vector.load %arg8[%c0_24, %c0_25] : memref<1x32xf32, #tpu.memory_space<vmem>>, vector<1x32xf32>
      %25 = vector.broadcast %24 : vector<1x32xf32> to vector<16x32xf32>
      %26 = arith.addf %23, %25 : vector<16x32xf32>
      %c0_26 = arith.constant 0 : index
      %c0_27 = arith.constant 0 : index
      %27 = vector.load %arg9[%c0_26, %c0_27] : memref<16x32xf32, #tpu.memory_space<vmem>>, vector<16x32xf32>
      tpu.vector_store %arg9[%c0_26, %c0_27], %26 {strides = array<i32>} : memref<16x32xf32, #tpu.memory_space<vmem>>, vector<16x32xf32>,
    } else {
    }
    return
  }
  func.func @transform_0(%arg0: i32, %arg1: i32, %arg2: i32) -> i32 {
    %c0_i32 = arith.constant 0 : i32
    %c0_i32_0 = arith.constant 0 : i32
    return %c0_i32 : i32
  }
  func.func @transform_1(%arg0: i32, %arg1: i32, %arg2: i32) -> (i32, i32) {
    %c0_i32 = arith.constant 0 : i32
    return %arg1, %arg2 : i32, i32
  }
  func.func @transform_2(%arg0: i32, %arg1: i32, %arg2: i32) -> (i32, i32) {
    %c0_i32 = arith.constant 0 : i32
    return %arg1, %arg2 : i32, i32
  }
  func.func @transform_3(%arg0: i32, %arg1: i32, %arg2: i32) -> (i32, i32) {
    %c0_i32 = arith.constant 0 : i32
    return %arg2, %arg0 : i32, i32
  }
  func.func @transform_4(%arg0: i32, %arg1: i32, %arg2: i32) -> (i32, i32) {
    %c0_i32 = arith.constant 0 : i32
    return %arg2, %arg0 : i32, i32
  }
  func.func @transform_5(%arg0: i32, %arg1: i32, %arg2: i32) -> (i32, i32) {
    %c0_i32 = arith.constant 0 : i32
    %c0_i32_0 = arith.constant 0 : i32
    return %c0_i32, %arg0 : i32, i32
  }
  func.func @transform_6(%arg0: i32, %arg1: i32, %arg2: i32) -> (i32, i32) {
    %c0_i32 = arith.constant 0 : i32
    return %arg1, %arg0 : i32, i32
  }
}

</mosaic_0001>

<llo_original>
// kernel: tpu_custom_call.1
$region0: #{tpu_custom_call.1}
  #allocation0 [shape = 'u32[]', space=smem, size = 0x4, offset = 0x4, fixed_abs, tag = 'smem constant byte address 0x4 - core index']
  #allocation1 [shape = 'u32[144,128]{1,0:T(1,128)}', space=vmem, size = 0x12000, scoped, tag = 'internal scratch']
  #allocation2 [shape = 'f32[16,32]{1,0:T(8,128)}', space=vmem, size = 0x2000, scoped, tag = 'scratch operand']
  #allocation3 [shape = 'f32[16,32]{1,0:T(8,128)}', space=vmem, size = 0x2000, scoped, tag = 'scratch operand']
  #allocation4 [shape = 'f32[1]{0:T(128)S(6)}', space=smem, size = 0x200, scoped, tag = 'scoped memory for tpu_custom_call.1']
  %s0 = inlined_call_operand.<no memory space> [shape: f32[1], index: 0, kind: input, shape index: {}]
  %s1 = inlined_call_operand.hbm [shape: bf16[16,32], index: 1, kind: input, shape index: {}]
  %s2 = inlined_call_operand.hbm [shape: bf16[16,32], index: 2, kind: input, shape index: {}]
  %s3 = inlined_call_operand.hbm [shape: bf16[32,32], index: 3, kind: input, shape index: {}]
  %s4 = inlined_call_operand.hbm [shape: bf16[32,32], index: 4, kind: input, shape index: {}]
  %s5 = inlined_call_operand.vmem [shape: f32[1,32], index: 5, kind: input, shape index: {}]
  %s6 = inlined_call_operand.hbm [shape: f32[16,32], index: 6, kind: output, shape index: {}]
  %s7 = sld [smem:[#allocation0]]
  $region58: #{tpu_custom_call.1} parent=0
    _
  %s9 = ssub.s32 1, %s7
  %s10 = scalar_select 0, %s9, %s7
  %11 = sst [smem:[#allocation4]] %s0
  $region1: #{tpu_custom_call.1} parent=0
    #allocation5 [shape = 'u8[4096]{0}', space=vmem, size = 0x1000, scoped, tag = 'input window, operand 1, single buffered']
    #allocation6 [shape = 's32[1]{0}', space=sflag, size = 0x4, scoped, tag = 'scoped memory for tpu_custom_call.1']
    #allocation7 [shape = 's32[1]{0}', space=sflag, size = 0x4, scoped, tag = 'scoped memory for tpu_custom_call.1']
    #allocation8 [shape = 'u8[4096]{0}', space=vmem, size = 0x1000, scoped, tag = 'input window, operand 2, single buffered']
    #allocation9 [shape = 's32[1]{0}', space=sflag, size = 0x4, scoped, tag = 'scoped memory for tpu_custom_call.1']
    #allocation10 [shape = 'u8[8192]{0}', space=vmem, size = 0x2000, scoped, tag = 'input window, operand 3, single buffered']
    #allocation11 [shape = 'u8[8192]{0}', space=vmem, size = 0x2000, scoped, tag = 'input window, operand 4, single buffered']
    #allocation12 [shape = 's32[1]{0}', space=sflag, size = 0x4, scoped, tag = 'scoped memory for tpu_custom_call.1']
    #allocation13 [shape = 'u8[8192]{0}', space=vmem, size = 0x2000, scoped, tag = 'output window, operand 0, single buffered']
    %12 = vsyncpa [#allocation6], 0
    %13 = vsyncpa [#allocation9], 0
    %14 = vsyncpa [#allocation12], 0
    %15 = vsyncpa [#allocation7], 0
    // Predicated region
    $region2: #{tpu_custom_call.1} parent=1 // pred_check
      _
    $region3: #{tpu_custom_call.1} parent=1 // pred_check_branch
      %17 = sbr.rel (0) target = $region5
    $region4: #{tpu_custom_call.1} parent=1 // pred_region
      _
    $region5: #{tpu_custom_call.1} parent=1 // pred_fallthru
      _
    // Predicated region
    $region6: #{tpu_custom_call.1} parent=1 // pred_check
      _
    $region7: #{tpu_custom_call.1} parent=1 // pred_check_branch
      %19 = sbr.rel (0) target = $region9
    $region8: #{tpu_custom_call.1} parent=1 // pred_region
      %s21 = ssub.s32 128, 128
      %22 = vsyncadd [#allocation6], %s21
      %s23 = sshll.u32 [#allocation5], 4
      %s24 = int_to_ptr.vmem [resolvable:$true] %s23
      %29 = dma.hbm_to_vmem [thread:$0]  %s1, 128, %s24, [#allocation6], 64, 64, 4
    $region9: #{tpu_custom_call.1} parent=1 // pred_fallthru
      _
    // Predicated region
    $region10: #{tpu_custom_call.1} parent=1 // pred_check
      _
    $region11: #{tpu_custom_call.1} parent=1 // pred_check_branch
      %31 = sbr.rel (0) target = $region13
    $region12: #{tpu_custom_call.1} parent=1 // pred_region
      %s33 = ssub.s32 128, 128
      %34 = vsyncadd [#allocation9], %s33
      %s35 = sshll.u32 [#allocation8], 4
      %s36 = int_to_ptr.vmem [resolvable:$true] %s35
      %41 = dma.hbm_to_vmem [thread:$0]  %s2, 128, %s36, [#allocation9], 64, 64, 4
    $region13: #{tpu_custom_call.1} parent=1 // pred_fallthru
      _
    // Predicated region
    $region14: #{tpu_custom_call.1} parent=1 // pred_check
      _
    $region15: #{tpu_custom_call.1} parent=1 // pred_check_branch
      %43 = sbr.rel (0) target = $region17
    $region16: #{tpu_custom_call.1} parent=1 // pred_region
      %s45 = ssub.s32 256, 256
      %46 = vsyncadd [#allocation9], %s45
      %s47 = sshll.u32 [#allocation10], 4
      %s48 = int_to_ptr.vmem [resolvable:$true] %s47
      %53 = dma.hbm_to_vmem [thread:$0]  %s3, 256, %s48, [#allocation9], 64, 64, 4
    $region17: #{tpu_custom_call.1} parent=1 // pred_fallthru
      _
    // Predicated region
    $region18: #{tpu_custom_call.1} parent=1 // pred_check
      _
    $region19: #{tpu_custom_call.1} parent=1 // pred_check_branch
      %55 = sbr.rel (0) target = $region21
    $region20: #{tpu_custom_call.1} parent=1 // pred_region
      %s57 = ssub.s32 256, 256
      %58 = vsyncadd [#allocation12], %s57
      %s59 = sshll.u32 [#allocation11], 4
      %s60 = int_to_ptr.vmem [resolvable:$true] %s59
      %65 = dma.hbm_to_vmem [thread:$0]  %s4, 256, %s60, [#allocation12], 64, 64, 4
    $region21: #{tpu_custom_call.1} parent=1 // pred_fallthru
      _
    // Predicated region
    $region22: #{tpu_custom_call.1} parent=1 // pred_check
      _
    $region23: #{tpu_custom_call.1} parent=1 // pred_check_branch
      %67 = sbr.rel (0) target = $region25
    $region24: #{tpu_custom_call.1} parent=1 // pred_region
      _
    $region25: #{tpu_custom_call.1} parent=1 // pred_fallthru
      _
    // Predicated region
    $region26: #{tpu_custom_call.1} parent=1 // pred_check
      _
    $region27: #{tpu_custom_call.1} parent=1 // pred_check_branch
      %69 = sbr.rel (0) target = $region29
    $region28: #{tpu_custom_call.1} parent=1 // pred_region
      %70 = dma.done [#allocation6], 128
    $region29: #{tpu_custom_call.1} parent=1 // pred_fallthru
      _
    // Predicated region
    $region30: #{tpu_custom_call.1} parent=1 // pred_check
      _
    $region31: #{tpu_custom_call.1} parent=1 // pred_check_branch
      %72 = sbr.rel (0) target = $region33
    $region32: #{tpu_custom_call.1} parent=1 // pred_region
      %73 = dma.done [#allocation9], 128
    $region33: #{tpu_custom_call.1} parent=1 // pred_fallthru
      _
    // Predicated region
    $region34: #{tpu_custom_call.1} parent=1 // pred_check
      _
    $region35: #{tpu_custom_call.1} parent=1 // pred_check_branch
      %75 = sbr.rel (0) target = $region37
    $region36: #{tpu_custom_call.1} parent=1 // pred_region
      %76 = dma.done [#allocation9], 256
    $region37: #{tpu_custom_call.1} parent=1 // pred_fallthru
      _
    // Predicated region
    $region38: #{tpu_custom_call.1} parent=1 // pred_check
      _
    $region39: #{tpu_custom_call.1} parent=1 // pred_check_branch
      %78 = sbr.rel (0) target = $region41
    $region40: #{tpu_custom_call.1} parent=1 // pred_region
      %79 = dma.done [#allocation12], 256
    $region41: #{tpu_custom_call.1} parent=1 // pred_fallthru
      _
    %p81 = scmp.eq.s32.totalorder 0, 0
    // Predicated region
    $region42: #{tpu_custom_call.1} parent=1 // pred_check
      %p82 = pneg %p81
    $region43: #{tpu_custom_call.1} parent=1 // pred_check_branch
      %84 = sbr.rel (%p82) target = $region45
    $region44: #{tpu_custom_call.1} parent=1 // pred_region
      %vm85 = vcmask 261120
      %86 = vst.msk [vmem:[#allocation2] sm:$0xff] %vm85, 0.0
      %87 = vst.msk [vmem:[#allocation2 + $0x8] sm:$0xff] %vm85, 0.0
      %88 = vst.msk [vmem:[#allocation3] sm:$0xff] %vm85, 0.0
      %89 = vst.msk [vmem:[#allocation3 + $0x8] sm:$0xff] %vm85, 0.0
    $region45: #{tpu_custom_call.1} parent=1 // pred_fallthru
      _
    %v90 = vld [vmem:[#allocation2] sm:$0xff]
    %v91 = vld [vmem:[#allocation2 + $0x8] sm:$0xff]
    %v92 = vld [vmem:[#allocation5] sm:$0xf]
    %v93 = vld [vmem:[#allocation5 + $0x4] sm:$0xf]
    %v94 = vld [vmem:[#allocation10] sm:$0xf]
    %v95 = vld [vmem:[#allocation10 + $0x4] sm:$0xf]
    %v96 = vld [vmem:[#allocation10 + $0x8] sm:$0xf]
    %v97 = vld [vmem:[#allocation10 + $0xc] sm:$0xf]
    %v100 = vunpack.c.l.b16 %v92
    %v101 = vunpack.c.l.b16 %v93
    %v102 = vpack.c.b16 %v101, %v100
    %v107 = vunpack.c.l.b16 %v94
    %v108 = vunpack.c.l.b16 %v95
    %v109 = vunpack.c.l.b16 %v96
    %v110 = vunpack.c.l.b16 %v97
    %v111 = vpack.c.b16 %v108, %v107
    %v112 = vpack.c.b16 %v110, %v109
    %vm115 = vcmask 261120
    %v117 = vsel %vm115, %v102, 0
    %119 = vmatprep.subr.bf16.mxu0 0
    %120 = vmatpush1.bf16.msra.mxu0 0
    %121 = vmatprep.subr.bf16.mxu0 0
    %122 = vmatpush1.bf16.msra.mxu0 0
    %123 = vmatprep.subr.bf16.mxu0 0
    %124 = vmatpush1.bf16.msra.mxu0 0
    %125 = vmatprep.subr.bf16.mxu0 0
    %126 = vmatpush1.bf16.msra.mxu0 0
    %127 = vmatprep.subr.bf16.mxu0 0
    %128 = vmatpush1.bf16.msra.mxu0 0
    %129 = vmatprep.subr.bf16.mxu0 0
    %130 = vmatpush1.bf16.msra.mxu0 0
    %131 = vmatprep.subr.bf16.mxu0 0
    %132 = vmatpush1.bf16.msra.mxu0 %v112
    %133 = vmatprep.subr.bf16.mxu0 0
    %134 = vmatpush1.bf16.msra.mxu0 %v111
    %135 = vmatprep.subr.bf16.mxu0 0
    %136 = vmatpush2.bf16.msra.mxu0 0
    %137 = vmatprep.subr.bf16.mxu0 0
    %138 = vmatpush2.bf16.msra.mxu0 0
    %139 = vmatprep.subr.bf16.mxu0 0
    %140 = vmatpush2.bf16.msra.mxu0 0
    %141 = vmatprep.subr.bf16.mxu0 0
    %142 = vmatpush2.bf16.msra.mxu0 0
    %143 = vmatprep.subr.bf16.mxu0 0
    %144 = vmatpush2.bf16.msra.mxu0 0
    %145 = vmatprep.subr.bf16.mxu0 0
    %146 = vmatpush2.bf16.msra.mxu0 0
    %147 = vmatprep.subr.bf16.mxu0 0
    %148 = vmatpush2.bf16.msra.mxu0 0
    %149 = vmatprep.subr.bf16.mxu0 0
    %150 = vmatpush2.bf16.msra.mxu0 0
    %151 = vmatprep.mubr.bf16.mxu0 0
    %152 = vmatmul.mubr.bf16.gmra.mxu0 %v117
    %v153 = vpop.f32.mrf.mxu0
    %v154 = vadd.f32 0.0, %v153
    %v155 = vpop.f32.mrf.mxu0
    %v156 = vpop.f32.mrf.mxu0
    %v157 = vadd.f32 0.0, %v156
    %v158 = vpop.f32.mrf.mxu0
    %159 = vdwg.mxu0
    %v160 = vadd.f32 %v90, %v154
    %v161 = vadd.f32 %v91, %v157
    %162 = vst.msk [vmem:[#allocation2] sm:$0xff] %vm115, %v160
    %163 = vst.msk [vmem:[#allocation2 + $0x8] sm:$0xff] %vm115, %v161
    %v164 = vld [vmem:[#allocation3] sm:$0xff]
    %v165 = vld [vmem:[#allocation3 + $0x8] sm:$0xff]
    %v166 = vld [vmem:[#allocation8] sm:$0xf]
    %v167 = vld [vmem:[#allocation8 + $0x4] sm:$0xf]
    %v168 = vld [vmem:[#allocation11] sm:$0xf]
    %v169 = vld [vmem:[#allocation11 + $0x4] sm:$0xf]
    %v170 = vld [vmem:[#allocation11 + $0x8] sm:$0xf]
    %v171 = vld [vmem:[#allocation11 + $0xc] sm:$0xf]
    %v174 = vunpack.c.l.b16 %v166
    %v175 = vunpack.c.l.b16 %v167
    %v176 = vpack.c.b16 %v175, %v174
    %v181 = vunpack.c.l.b16 %v168
    %v182 = vunpack.c.l.b16 %v169
    %v183 = vunpack.c.l.b16 %v170
    %v184 = vunpack.c.l.b16 %v171
    %v185 = vpack.c.b16 %v182, %v181
    %v186 = vpack.c.b16 %v184, %v183
    %v190 = vsel %vm115, %v176, 0
    %192 = vmatprep.subr.bf16.mxu0 0
    %193 = vmatpush1.bf16.msra.mxu0 0
    %194 = vmatprep.subr.bf16.mxu0 0
    %195 = vmatpush1.bf16.msra.mxu0 0
    %196 = vmatprep.subr.bf16.mxu0 0
    %197 = vmatpush1.bf16.msra.mxu0 0
    %198 = vmatprep.subr.bf16.mxu0 0
    %199 = vmatpush1.bf16.msra.mxu0 0
    %200 = vmatprep.subr.bf16.mxu0 0
    %201 = vmatpush1.bf16.msra.mxu0 0
    %202 = vmatprep.subr.bf16.mxu0 0
    %203 = vmatpush1.bf16.msra.mxu0 0
    %204 = vmatprep.subr.bf16.mxu0 0
    %205 = vmatpush1.bf16.msra.mxu0 %v186
    %206 = vmatprep.subr.bf16.mxu0 0
    %207 = vmatpush1.bf16.msra.mxu0 %v185
    %208 = vmatprep.subr.bf16.mxu0 0
    %209 = vmatpush2.bf16.msra.mxu0 0
    %210 = vmatprep.subr.bf16.mxu0 0
    %211 = vmatpush2.bf16.msra.mxu0 0
    %212 = vmatprep.subr.bf16.mxu0 0
    %213 = vmatpush2.bf16.msra.mxu0 0
    %214 = vmatprep.subr.bf16.mxu0 0
    %215 = vmatpush2.bf16.msra.mxu0 0
    %216 = vmatprep.subr.bf16.mxu0 0
    %217 = vmatpush2.bf16.msra.mxu0 0
    %218 = vmatprep.subr.bf16.mxu0 0
    %219 = vmatpush2.bf16.msra.mxu0 0
    %220 = vmatprep.subr.bf16.mxu0 0
    %221 = vmatpush2.bf16.msra.mxu0 0
    %222 = vmatprep.subr.bf16.mxu0 0
    %223 = vmatpush2.bf16.msra.mxu0 0
    %224 = vmatprep.mubr.bf16.mxu0 0
    %225 = vmatmul.mubr.bf16.gmra.mxu0 %v190
    %v226 = vpop.f32.mrf.mxu0
    %v227 = vadd.f32 0.0, %v226
    %v228 = vpop.f32.mrf.mxu0
    %v229 = vpop.f32.mrf.mxu0
    %v230 = vadd.f32 0.0, %v229
    %v231 = vpop.f32.mrf.mxu0
    %232 = vdwg.mxu0
    %v233 = vadd.f32 %v164, %v227
    %v234 = vadd.f32 %v165, %v230
    %235 = vst.msk [vmem:[#allocation3] sm:$0xff] %vm115, %v233
    %236 = vst.msk [vmem:[#allocation3 + $0x8] sm:$0xff] %vm115, %v234
    // Predicated region
    $region46: #{tpu_custom_call.1} parent=1 // pred_check
      %p237 = pneg %p81
    $region47: #{tpu_custom_call.1} parent=1 // pred_check_branch
      %239 = sbr.rel (%p237) target = $region49
    $region48: #{tpu_custom_call.1} parent=1 // pred_region
      %s240 = sld [smem:[#allocation4]]
      %v241 = vld [vmem:[#allocation2] sm:$0xff]
      %v242 = vld [vmem:[#allocation2 + $0x8] sm:$0xff]
      %v243 = vstv %s240
      %v244 = vmul.f32 %v241, %v243
      %v245 = vmul.f32 %v242, %v243
      %v246 = vld [vmem:[#allocation3] sm:$0xff]
      %v247 = vld [vmem:[#allocation3 + $0x8] sm:$0xff]
      %v248 = vadd.f32 %v244, %v246
      %v249 = vadd.f32 %v245, %v247
      %v250 = vld [vmem:[%s5] sm:$0x1]
      %v252 = vlaneseq
      %v253 = vshrl.u32 %v252, 7
      %v254 = vsub.s32 0, %v253
      %v255 = vrot.slane %v250, %v254
      %v257 = vadd.f32 %v248, %v255
      %v258 = vadd.f32 %v249, %v255
      %259 = vst.msk [vmem:[#allocation13] sm:$0xff] %vm115, %v257
      %260 = vst.msk [vmem:[#allocation13 + $0x8] sm:$0xff] %vm115, %v258
    $region49: #{tpu_custom_call.1} parent=1 // pred_fallthru
      _
    // Predicated region
    $region50: #{tpu_custom_call.1} parent=1 // pred_check
      _
    $region51: #{tpu_custom_call.1} parent=1 // pred_check_branch
      %262 = sbr.rel (0) target = $region53
    $region52: #{tpu_custom_call.1} parent=1 // pred_region
      %s264 = ssub.s32 256, 256
      %265 = vsyncadd [#allocation7], %s264
      %s266 = sshll.u32 [#allocation13], 4
      %s267 = int_to_ptr.vmem [resolvable:$true] %s266
      %272 = dma.vmem_to_hbm [thread:$0]  %s267, 256, %s6, [#allocation7], 128, 128, 8
    $region53: #{tpu_custom_call.1} parent=1 // pred_fallthru
      _
    // Predicated region
    $region54: #{tpu_custom_call.1} parent=1 // pred_check
      _
    $region55: #{tpu_custom_call.1} parent=1 // pred_check_branch
      %274 = sbr.rel (0) target = $region57
    $region56: #{tpu_custom_call.1} parent=1 // pred_region
      %275 = dma.done [#allocation7], 256
    $region57: #{tpu_custom_call.1} parent=1 // pred_fallthru
      _
    %276 = vsyncpa [#allocation6], 1
    %277 = vsyncpa [#allocation9], 1
    %278 = vsyncpa [#allocation12], 1
    %279 = vsyncpa [#allocation7], 1

// kernel: tpu_custom_call.1
$region0: #{tpu_custom_call.1}
  #allocation0 [shape = 'u32[]', space=smem, size = 0x4, offset = 0x4, fixed_abs, tag = 'smem constant byte address 0x4 - core index']
  #allocation1 [shape = 'u32[144,128]{1,0:T(1,128)}', space=vmem, size = 0x12000, scoped, tag = 'internal scratch']
  #allocation2 [shape = 'f32[16,32]{1,0:T(8,128)}', space=vmem, size = 0x2000, scoped, tag = 'scratch operand']
  #allocation3 [shape = 'f32[16,32]{1,0:T(8,128)}', space=vmem, size = 0x2000, scoped, tag = 'scratch operand']
  #allocation4 [shape = 'f32[1]{0:T(128)S(6)}', space=smem, size = 0x200, scoped, tag = 'scoped memory for tpu_custom_call.1']
  %s0 = inlined_call_operand.<no memory space> [shape: f32[1], index: 0, kind: input, shape index: {}]
  %s1 = inlined_call_operand.hbm [shape: bf16[16,32], index: 1, kind: input, shape index: {}]
  %s2 = inlined_call_operand.hbm [shape: bf16[16,32], index: 2, kind: input, shape index: {}]
  %s3 = inlined_call_operand.hbm [shape: bf16[32,32], index: 3, kind: input, shape index: {}]
  %s4 = inlined_call_operand.hbm [shape: bf16[32,32], index: 4, kind: input, shape index: {}]
  %s5 = inlined_call_operand.vmem [shape: f32[1,32], index: 5, kind: input, shape index: {}]
  %s6 = inlined_call_operand.hbm [shape: f32[16,32], index: 6, kind: output, shape index: {}]
  %s7 = sld [smem:[#allocation0]]
  $region58: #{tpu_custom_call.1} parent=0
    _
  %s9 = ssub.s32 1, %s7
  %s10 = scalar_select 0, %s9, %s7
  %11 = sst [smem:[#allocation4]] %s0
  $region1: #{tpu_custom_call.1} parent=0
    #allocation5 [shape = 'u8[4096]{0}', space=vmem, size = 0x1000, scoped, tag = 'input window, operand 1, single buffered']
    #allocation6 [shape = 's32[1]{0}', space=sflag, size = 0x4, scoped, tag = 'scoped memory for tpu_custom_call.1']
    #allocation7 [shape = 's32[1]{0}', space=sflag, size = 0x4, scoped, tag = 'scoped memory for tpu_custom_call.1']
    #allocation8 [shape = 'u8[4096]{0}', space=vmem, size = 0x1000, scoped, tag = 'input window, operand 2, single buffered']
    #allocation9 [shape = 's32[1]{0}', space=sflag, size = 0x4, scoped, tag = 'scoped memory for tpu_custom_call.1']
    #allocation10 [shape = 'u8[8192]{0}', space=vmem, size = 0x2000, scoped, tag = 'input window, operand 3, single buffered']
    #allocation11 [shape = 'u8[8192]{0}', space=vmem, size = 0x2000, scoped, tag = 'input window, operand 4, single buffered']
    #allocation12 [shape = 's32[1]{0}', space=sflag, size = 0x4, scoped, tag = 'scoped memory for tpu_custom_call.1']
    #allocation13 [shape = 'u8[8192]{0}', space=vmem, size = 0x2000, scoped, tag = 'output window, operand 0, single buffered']
    %12 = vsyncpa [#allocation6], 0
    %13 = vsyncpa [#allocation9], 0
    %14 = vsyncpa [#allocation12], 0
    %15 = vsyncpa [#allocation7], 0
    // Predicated region
    $region2: #{tpu_custom_call.1} parent=1 // pred_check
      _
    $region3: #{tpu_custom_call.1} parent=1 // pred_check_branch
      %17 = sbr.rel (0) target = $region5
    $region4: #{tpu_custom_call.1} parent=1 // pred_region
      _
    $region5: #{tpu_custom_call.1} parent=1 // pred_fallthru
      _
    // Predicated region
    $region6: #{tpu_custom_call.1} parent=1 // pred_check
      _
    $region7: #{tpu_custom_call.1} parent=1 // pred_check_branch
      %19 = sbr.rel (0) target = $region9
    $region8: #{tpu_custom_call.1} parent=1 // pred_region
      %s21 = ssub.s32 128, 128
      %22 = vsyncadd [#allocation6], %s21
      %s23 = sshll.u32 [#allocation5], 4
      %s24 = int_to_ptr.vmem [resolvable:$true] %s23
      %29 = dma.hbm_to_vmem [thread:$0]  %s1, 128, %s24, [#allocation6], 64, 64, 4
    $region9: #{tpu_custom_call.1} parent=1 // pred_fallthru
      _
    // Predicated region
    $region10: #{tpu_custom_call.1} parent=1 // pred_check
      _
    $region11: #{tpu_custom_call.1} parent=1 // pred_check_branch
      %31 = sbr.rel (0) target = $region13
    $region12: #{tpu_custom_call.1} parent=1 // pred_region
      %s33 = ssub.s32 128, 128
      %34 = vsyncadd [#allocation9], %s33
      %s35 = sshll.u32 [#allocation8], 4
      %s36 = int_to_ptr.vmem [resolvable:$true] %s35
      %41 = dma.hbm_to_vmem [thread:$0]  %s2, 128, %s36, [#allocation9], 64, 64, 4
    $region13: #{tpu_custom_call.1} parent=1 // pred_fallthru
      _
    // Predicated region
    $region14: #{tpu_custom_call.1} parent=1 // pred_check
      _
    $region15: #{tpu_custom_call.1} parent=1 // pred_check_branch
      %43 = sbr.rel (0) target = $region17
    $region16: #{tpu_custom_call.1} parent=1 // pred_region
      %s45 = ssub.s32 256, 256
      %46 = vsyncadd [#allocation9], %s45
      %s47 = sshll.u32 [#allocation10], 4
      %s48 = int_to_ptr.vmem [resolvable:$true] %s47
      %53 = dma.hbm_to_vmem [thread:$0]  %s3, 256, %s48, [#allocation9], 64, 64, 4
    $region17: #{tpu_custom_call.1} parent=1 // pred_fallthru
      _
    // Predicated region
    $region18: #{tpu_custom_call.1} parent=1 // pred_check
      _
    $region19: #{tpu_custom_call.1} parent=1 // pred_check_branch
      %55 = sbr.rel (0) target = $region21
    $region20: #{tpu_custom_call.1} parent=1 // pred_region
      %s57 = ssub.s32 256, 256
      %58 = vsyncadd [#allocation12], %s57
      %s59 = sshll.u32 [#allocation11], 4
      %s60 = int_to_ptr.vmem [resolvable:$true] %s59
      %65 = dma.hbm_to_vmem [thread:$0]  %s4, 256, %s60, [#allocation12], 64, 64, 4
    $region21: #{tpu_custom_call.1} parent=1 // pred_fallthru
      _
    // Predicated region
    $region22: #{tpu_custom_call.1} parent=1 // pred_check
      _
    $region23: #{tpu_custom_call.1} parent=1 // pred_check_branch
      %67 = sbr.rel (0) target = $region25
    $region24: #{tpu_custom_call.1} parent=1 // pred_region
      _
    $region25: #{tpu_custom_call.1} parent=1 // pred_fallthru
      _
    // Predicated region
    $region26: #{tpu_custom_call.1} parent=1 // pred_check
      _
    $region27: #{tpu_custom_call.1} parent=1 // pred_check_branch
      %69 = sbr.rel (0) target = $region29
    $region28: #{tpu_custom_call.1} parent=1 // pred_region
      %70 = dma.done [#allocation6], 128
    $region29: #{tpu_custom_call.1} parent=1 // pred_fallthru
      _
    // Predicated region
    $region30: #{tpu_custom_call.1} parent=1 // pred_check
      _
    $region31: #{tpu_custom_call.1} parent=1 // pred_check_branch
      %72 = sbr.rel (0) target = $region33
    $region32: #{tpu_custom_call.1} parent=1 // pred_region
      %73 = dma.done [#allocation9], 128
    $region33: #{tpu_custom_call.1} parent=1 // pred_fallthru
      _
    // Predicated region
    $region34: #{tpu_custom_call.1} parent=1 // pred_check
      _
    $region35: #{tpu_custom_call.1} parent=1 // pred_check_branch
      %75 = sbr.rel (0) target = $region37
    $region36: #{tpu_custom_call.1} parent=1 // pred_region
      %76 = dma.done [#allocation9], 256
    $region37: #{tpu_custom_call.1} parent=1 // pred_fallthru
      _
    // Predicated region
    $region38: #{tpu_custom_call.1} parent=1 // pred_check
      _
    $region39: #{tpu_custom_call.1} parent=1 // pred_check_branch
      %78 = sbr.rel (0) target = $region41
    $region40: #{tpu_custom_call.1} parent=1 // pred_region
      %79 = dma.done [#allocation12], 256
    $region41: #{tpu_custom_call.1} parent=1 // pred_fallthru
      _
    %p81 = scmp.eq.s32.totalorder 0, 0
    // Predicated region
    $region42: #{tpu_custom_call.1} parent=1 // pred_check
      %p82 = pneg %p81
    $region43: #{tpu_custom_call.1} parent=1 // pred_check_branch
      %84 = sbr.rel (%p82) target = $region45
    $region44: #{tpu_custom_call.1} parent=1 // pred_region
      %vm85 = vcmask 261120
      %86 = vst.msk [vmem:[#allocation2] sm:$0xff] %vm85, 0.0
      %87 = vst.msk [vmem:[#allocation2 + $0x8] sm:$0xff] %vm85, 0.0
      %88 = vst.msk [vmem:[#allocation3] sm:$0xff] %vm85, 0.0
      %89 = vst.msk [vmem:[#allocation3 + $0x8] sm:$0xff] %vm85, 0.0
    $region45: #{tpu_custom_call.1} parent=1 // pred_fallthru
      _
    %v90 = vld [vmem:[#allocation2] sm:$0xff]
    %v91 = vld [vmem:[#allocation2 + $0x8] sm:$0xff]
    %v92 = vld [vmem:[#allocation5] sm:$0xf]
    %v93 = vld [vmem:[#allocation5 + $0x4] sm:$0xf]
    %v94 = vld [vmem:[#allocation10] sm:$0xf]
    %v95 = vld [vmem:[#allocation10 + $0x4] sm:$0xf]
    %v96 = vld [vmem:[#allocation10 + $0x8] sm:$0xf]
    %v97 = vld [vmem:[#allocation10 + $0xc] sm:$0xf]
    %v100 = vunpack.c.l.b16 %v92
    %v101 = vunpack.c.l.b16 %v93
    %v102 = vpack.c.b16 %v101, %v100
    %v107 = vunpack.c.l.b16 %v94
    %v108 = vunpack.c.l.b16 %v95
    %v109 = vunpack.c.l.b16 %v96
    %v110 = vunpack.c.l.b16 %v97
    %v111 = vpack.c.b16 %v108, %v107
    %v112 = vpack.c.b16 %v110, %v109
    %vm115 = vcmask 261120
    %v117 = vsel %vm115, %v102, 0
    %119 = vmatprep.subr.bf16.mxu0 0
    %120 = vmatpush1.bf16.msra.mxu0 0
    %121 = vmatprep.subr.bf16.mxu0 0
    %122 = vmatpush1.bf16.msra.mxu0 0
    %123 = vmatprep.subr.bf16.mxu0 0
    %124 = vmatpush1.bf16.msra.mxu0 0
    %125 = vmatprep.subr.bf16.mxu0 0
    %126 = vmatpush1.bf16.msra.mxu0 0
    %127 = vmatprep.subr.bf16.mxu0 0
    %128 = vmatpush1.bf16.msra.mxu0 0
    %129 = vmatprep.subr.bf16.mxu0 0
    %130 = vmatpush1.bf16.msra.mxu0 0
    %131 = vmatprep.subr.bf16.mxu0 0
    %132 = vmatpush1.bf16.msra.mxu0 %v112
    %133 = vmatprep.subr.bf16.mxu0 0
    %134 = vmatpush1.bf16.msra.mxu0 %v111
    %135 = vmatprep.subr.bf16.mxu0 0
    %136 = vmatpush2.bf16.msra.mxu0 0
    %137 = vmatprep.subr.bf16.mxu0 0
    %138 = vmatpush2.bf16.msra.mxu0 0
    %139 = vmatprep.subr.bf16.mxu0 0
    %140 = vmatpush2.bf16.msra.mxu0 0
    %141 = vmatprep.subr.bf16.mxu0 0
    %142 = vmatpush2.bf16.msra.mxu0 0
    %143 = vmatprep.subr.bf16.mxu0 0
    %144 = vmatpush2.bf16.msra.mxu0 0
    %145 = vmatprep.subr.bf16.mxu0 0
    %146 = vmatpush2.bf16.msra.mxu0 0
    %147 = vmatprep.subr.bf16.mxu0 0
    %148 = vmatpush2.bf16.msra.mxu0 0
    %149 = vmatprep.subr.bf16.mxu0 0
    %150 = vmatpush2.bf16.msra.mxu0 0
    %151 = vmatprep.mubr.bf16.mxu0 0
    %152 = vmatmul.mubr.bf16.gmra.mxu0 %v117
    %v153 = vpop.f32.mrf.mxu0
    %v154 = vadd.f32 0.0, %v153
    %v155 = vpop.f32.mrf.mxu0
    %v156 = vpop.f32.mrf.mxu0
    %v157 = vadd.f32 0.0, %v156
    %v158 = vpop.f32.mrf.mxu0
    %159 = vdwg.mxu0
    %v160 = vadd.f32 %v90, %v154
    %v161 = vadd.f32 %v91, %v157
    %162 = vst.msk [vmem:[#allocation2] sm:$0xff] %vm115, %v160
    %163 = vst.msk [vmem:[#allocation2 + $0x8] sm:$0xff] %vm115, %v161
    %v164 = vld [vmem:[#allocation3] sm:$0xff]
    %v165 = vld [vmem:[#allocation3 + $0x8] sm:$0xff]
    %v166 = vld [vmem:[#allocation8] sm:$0xf]
    %v167 = vld [vmem:[#allocation8 + $0x4] sm:$0xf]
    %v168 = vld [vmem:[#allocation11] sm:$0xf]
    %v169 = vld [vmem:[#allocation11 + $0x4] sm:$0xf]
    %v170 = vld [vmem:[#allocation11 + $0x8] sm:$0xf]
    %v171 = vld [vmem:[#allocation11 + $0xc] sm:$0xf]
    %v174 = vunpack.c.l.b16 %v166
    %v175 = vunpack.c.l.b16 %v167
    %v176 = vpack.c.b16 %v175, %v174
    %v181 = vunpack.c.l.b16 %v168
    %v182 = vunpack.c.l.b16 %v169
    %v183 = vunpack.c.l.b16 %v170
    %v184 = vunpack.c.l.b16 %v171
    %v185 = vpack.c.b16 %v182, %v181
    %v186 = vpack.c.b16 %v184, %v183
    %v190 = vsel %vm115, %v176, 0
    %192 = vmatprep.subr.bf16.mxu0 0
    %193 = vmatpush1.bf16.msra.mxu0 0
    %194 = vmatprep.subr.bf16.mxu0 0
    %195 = vmatpush1.bf16.msra.mxu0 0
    %196 = vmatprep.subr.bf16.mxu0 0
    %197 = vmatpush1.bf16.msra.mxu0 0
    %198 = vmatprep.subr.bf16.mxu0 0
    %199 = vmatpush1.bf16.msra.mxu0 0
    %200 = vmatprep.subr.bf16.mxu0 0
    %201 = vmatpush1.bf16.msra.mxu0 0
    %202 = vmatprep.subr.bf16.mxu0 0
    %203 = vmatpush1.bf16.msra.mxu0 0
    %204 = vmatprep.subr.bf16.mxu0 0
    %205 = vmatpush1.bf16.msra.mxu0 %v186
    %206 = vmatprep.subr.bf16.mxu0 0
    %207 = vmatpush1.bf16.msra.mxu0 %v185
    %208 = vmatprep.subr.bf16.mxu0 0
    %209 = vmatpush2.bf16.msra.mxu0 0
    %210 = vmatprep.subr.bf16.mxu0 0
    %211 = vmatpush2.bf16.msra.mxu0 0
    %212 = vmatprep.subr.bf16.mxu0 0
    %213 = vmatpush2.bf16.msra.mxu0 0
    %214 = vmatprep.subr.bf16.mxu0 0
    %215 = vmatpush2.bf16.msra.mxu0 0
    %216 = vmatprep.subr.bf16.mxu0 0
    %217 = vmatpush2.bf16.msra.mxu0 0
    %218 = vmatprep.subr.bf16.mxu0 0
    %219 = vmatpush2.bf16.msra.mxu0 0
    %220 = vmatprep.subr.bf16.mxu0 0
    %221 = vmatpush2.bf16.msra.mxu0 0
    %222 = vmatprep.subr.bf16.mxu0 0
    %223 = vmatpush2.bf16.msra.mxu0 0
    %224 = vmatprep.mubr.bf16.mxu0 0
    %225 = vmatmul.mubr.bf16.gmra.mxu0 %v190
    %v226 = vpop.f32.mrf.mxu0
    %v227 = vadd.f32 0.0, %v226
    %v228 = vpop.f32.mrf.mxu0
    %v229 = vpop.f32.mrf.mxu0
    %v230 = vadd.f32 0.0, %v229
    %v231 = vpop.f32.mrf.mxu0
    %232 = vdwg.mxu0
    %v233 = vadd.f32 %v164, %v227
    %v234 = vadd.f32 %v165, %v230
    %235 = vst.msk [vmem:[#allocation3] sm:$0xff] %vm115, %v233
    %236 = vst.msk [vmem:[#allocation3 + $0x8] sm:$0xff] %vm115, %v234
    // Predicated region
    $region46: #{tpu_custom_call.1} parent=1 // pred_check
      %p237 = pneg %p81
    $region47: #{tpu_custom_call.1} parent=1 // pred_check_branch
      %239 = sbr.rel (%p237) target = $region49
    $region48: #{tpu_custom_call.1} parent=1 // pred_region
      %s240 = sld [smem:[#allocation4]]
      %v241 = vld [vmem:[#allocation2] sm:$0xff]
      %v242 = vld [vmem:[#allocation2 + $0x8] sm:$0xff]
      %v243 = vstv %s240
      %v244 = vmul.f32 %v241, %v243
      %v245 = vmul.f32 %v242, %v243
      %v246 = vld [vmem:[#allocation3] sm:$0xff]
      %v247 = vld [vmem:[#allocation3 + $0x8] sm:$0xff]
      %v248 = vadd.f32 %v244, %v246
      %v249 = vadd.f32 %v245, %v247
      %v250 = vld [vmem:[%s5] sm:$0x1]
      %v252 = vlaneseq
      %v253 = vshrl.u32 %v252, 7
      %v254 = vsub.s32 0, %v253
      %v255 = vrot.slane %v250, %v254
      %v257 = vadd.f32 %v248, %v255
      %v258 = vadd.f32 %v249, %v255
      %259 = vst.msk [vmem:[#allocation13] sm:$0xff] %vm115, %v257
      %260 = vst.msk [vmem:[#allocation13 + $0x8] sm:$0xff] %vm115, %v258
    $region49: #{tpu_custom_call.1} parent=1 // pred_fallthru
      _
    // Predicated region
    $region50: #{tpu_custom_call.1} parent=1 // pred_check
      _
    $region51: #{tpu_custom_call.1} parent=1 // pred_check_branch
      %262 = sbr.rel (0) target = $region53
    $region52: #{tpu_custom_call.1} parent=1 // pred_region
      %s264 = ssub.s32 256, 256
      %265 = vsyncadd [#allocation7], %s264
      %s266 = sshll.u32 [#allocation13], 4
      %s267 = int_to_ptr.vmem [resolvable:$true] %s266
      %272 = dma.vmem_to_hbm [thread:$0]  %s267, 256, %s6, [#allocation7], 128, 128, 8
    $region53: #{tpu_custom_call.1} parent=1 // pred_fallthru
      _
    // Predicated region
    $region54: #{tpu_custom_call.1} parent=1 // pred_check
      _
    $region55: #{tpu_custom_call.1} parent=1 // pred_check_branch
      %274 = sbr.rel (0) target = $region57
    $region56: #{tpu_custom_call.1} parent=1 // pred_region
      %275 = dma.done [#allocation7], 256
    $region57: #{tpu_custom_call.1} parent=1 // pred_fallthru
      _
    %276 = vsyncpa [#allocation6], 1
    %277 = vsyncpa [#allocation9], 1
    %278 = vsyncpa [#allocation12], 1
    %279 = vsyncpa [#allocation7], 1

</llo_original>
